<compile_context>
chip_gen: v7x
topology: tpu7x:2x2x1
jax: 0.10.0
libtpu: 0.0.40
codegen_flags: <defaults>
</compile_context>

<pallas_src>
import functools

import jax
import jax.numpy as jnp
from jax import lax
from jax.experimental import pallas as pl
from jax.experimental.pallas import tpu as pltpu


def _sdpa_kernel(q_ref, k_ref, v_ref, pad_ref, sub_ref, decay_ref, out_ref,
                 *attn_refs, inv_temperature, compute_dtype, write_attn):
    # Block shapes: q (1,TQ,Dk)  k (1,Lk,Dk)  v (1,Lk,Dv)  pad (1,1,Lk)
    #               sub/decay/attn (1,TQ,Lk)  out (1,TQ,Dv)
    tq = q_ref.shape[1]
    lk = k_ref.shape[1]

    q = q_ref[0] * inv_temperature          # scale the small operand
    k = k_ref[0]
    v = v_ref[0]
    if compute_dtype is not None:
        q = q.astype(compute_dtype)
        k = k.astype(compute_dtype)
        v = v.astype(compute_dtype)

    # scores = (q / temperature) @ k^T with the transpose folded into the
    # contraction (no materialized k.T / XLU relayout).
    scores = lax.dot_general(q, k, (((1,), (1,)), ((), ())),
                             preferred_element_type=jnp.float32)   # (TQ, Lk)

    # Softmax over keys. NOTE (by design): masking happens AFTER softmax, so
    # masked keys still contribute to the denominator, as in the PyTorch code.
    # Exact divide: the approx EUP reciprocal broke numeric parity and the EUP
    # is not the binding slot here anyway.
    m = jnp.max(scores, axis=-1, keepdims=True)
    e = jnp.exp(scores - m)
    p = e / jnp.sum(e, axis=-1, keepdims=True)

    # Post-softmax multiplicative gate, fused in-kernel in one pass + one select:
    #   (1 - mask_pad) * (1 - mask_sub) * decay_coef, zeroed above the diagonal.
    gate = ((1.0 - pad_ref[0].astype(jnp.float32)) *          # (1, Lk), row-bcast
            (1.0 - sub_ref[0].astype(jnp.float32)) *
            decay_ref[0].astype(jnp.float32))                  # (TQ, Lk)
    q0 = pl.program_id(1) * tq
    rows = lax.broadcasted_iota(jnp.int32, (tq, lk), 0) + q0   # global query index
    cols = lax.broadcasted_iota(jnp.int32, (tq, lk), 1)        # key index
    p = jnp.where(cols <= rows, p * gate, 0.0)

    if write_attn:
        attn_refs[0][0] = p.astype(attn_refs[0].dtype)
    out_ref[0] = jnp.dot(p.astype(v.dtype), v,
                         preferred_element_type=jnp.float32).astype(out_ref.dtype)


def _pick_q_tile(lq, target):
    """Largest power-of-two-ish divisor of lq that is <= target (or lq itself)."""
    if lq <= target:
        return lq
    t = target
    while t >= 8:
        if lq % t == 0:
            return t
        t //= 2
    return lq


def _vmem_limit_bytes():
    """~75% of this generation's per-core VMEM (~96 MiB v5e/v6e, ~48 MiB v7x).

    Returns None (compiler default) if the hardware cannot be queried
    (e.g. CPU interpreter / older runtimes).
    """
    try:
        cap = pltpu.get_tpu_info().vmem_capacity_bytes
    except Exception:
        return None
    return int(cap) * 3 // 4


def scaled_dot_product_attention(q, k, v, mask_pad, mask_sub, decay_coef,
                                 temperature, *,
                                 attn_dtype=jnp.bfloat16,
                                 compute_dtype=jnp.bfloat16,
                                 return_attn=True,
                                 q_block=None):
    """q, k: (B,H,Lq,Dk); v: (B,H,Lk,Dv); mask_pad: (B,1,1,Lk);
    mask_sub, decay_coef: (B,H,Lq,Lk). All masks use 1 == masked.

    The standard causal mask (triu, k=1; assumes query/key indices aligned) is
    generated inside the kernel. mask_sub / decay_coef are streamed at their
    incoming dtype — pass them as bfloat16 to halve the dominant L^2 read
    stream. Pass attn_dtype/compute_dtype = jnp.float32 for tight numerical
    parity with the f32 PyTorch reference. return_attn=False skips the
    (B,H,Lq,Lk) attention writeback entirely.
    """
    B, H, Lq, Dk = q.shape
    Lk = k.shape[2]
    Dv = v.shape[3]
    G = B * H
    if q_block is None:
        # Keep the per-step working set double-buffered on v7x's 64 MiB VMEM.
        q_block = 128 if Lk >= 4096 else 256
    TQ = _pick_q_tile(Lq, q_block)

    qf = q.reshape(G, Lq, Dk)
    kf = k.reshape(G, Lk, Dk)
    vf = v.reshape(G, Lk, Dv)
    # One tiny (Lk,) pad row per head (G*Lk elements — negligible traffic),
    # so the pad BlockSpec indexes directly with g.
    padf = jnp.broadcast_to(mask_pad.reshape(B, 1, 1, Lk),
                            (B, H, 1, Lk)).reshape(G, 1, Lk)
    subf = mask_sub.reshape(G, Lq, Lk)
    decayf = decay_coef.reshape(G, Lq, Lk)

    kernel = functools.partial(_sdpa_kernel,
                               inv_temperature=1.0 / float(temperature),
                               compute_dtype=compute_dtype,
                               write_attn=return_attn)

    out_spec = pl.BlockSpec((1, TQ, Dv), lambda g, t: (g, t, 0))
    if return_attn:
        out_shape = (jax.ShapeDtypeStruct((G, Lq, Dv), q.dtype),
                     jax.ShapeDtypeStruct((G, Lq, Lk), attn_dtype))
        out_specs = (out_spec,
                     pl.BlockSpec((1, TQ, Lk), lambda g, t: (g, t, 0)))
    else:
        out_shape = jax.ShapeDtypeStruct((G, Lq, Dv), q.dtype)
        out_specs = out_spec

    cp_kwargs = dict(dimension_semantics=("parallel", "parallel"))
    vmem_limit = _vmem_limit_bytes()
    if vmem_limit is not None:
        cp_kwargs["vmem_limit_bytes"] = vmem_limit

    result = pl.pallas_call(
        kernel,
        out_shape=out_shape,
        grid_spec=pltpu.PrefetchScalarGridSpec(
            num_scalar_prefetch=0,
            grid=(G, Lq // TQ),                                  # g outer, t inner
            in_specs=[
                pl.BlockSpec((1, TQ, Dk), lambda g, t: (g, t, 0)),   # q
                pl.BlockSpec((1, Lk, Dk), lambda g, t: (g, 0, 0)),   # k (resident over t)
                pl.BlockSpec((1, Lk, Dv), lambda g, t: (g, 0, 0)),   # v (resident over t)
                pl.BlockSpec((1, 1, Lk), lambda g, t: (g, 0, 0)),    # pad row
                pl.BlockSpec((1, TQ, Lk), lambda g, t: (g, t, 0)),   # mask_sub
                pl.BlockSpec((1, TQ, Lk), lambda g, t: (g, t, 0)),   # decay_coef
            ],
            out_specs=out_specs,
        ),
        compiler_params=pltpu.CompilerParams(**cp_kwargs),
    )(qf, kf, vf, padf, subf, decayf)

    if return_attn:
        out, attn = result
        return out.reshape(B, H, Lq, Dv), attn.reshape(B, H, Lq, Lk)
    return result.reshape(B, H, Lq, Dv)


def _reference(q, k, v, mask_pad, mask_sub, mask_causal, decay_coef, temperature):
    mask = 1.0 - (1.0 - mask_pad) * (1.0 - mask_sub) * (1.0 - mask_causal)
    attn = jnp.einsum("bhqd,bhkd->bhqk", q / temperature, k)
    attn = jax.nn.softmax(attn, axis=-1)
    attn = attn * (1.0 - mask)
    attn = attn * decay_coef
    out = jnp.einsum("bhqk,bhkd->bhqd", attn, v)
    return out, attn


def _run_case(key, B, H, L, Dk, Dv, *, compute_dtype, attn_dtype, q_block,
              atol, rtol, check_no_attn=False):
    temperature = float(Dk) ** 0.5
    kq, kk, kv, kp, ks, kd = jax.random.split(key, 6)

    q = jax.random.normal(kq, (B, H, L, Dk), dtype=jnp.float32)
    k = jax.random.normal(kk, (B, H, L, Dk), dtype=jnp.float32)
    v = jax.random.normal(kv, (B, H, L, Dv), dtype=jnp.float32)

    # 0/1 masks (1 == masked).
    mask_pad = (jax.random.uniform(kp, (B, 1, 1, L)) < 0.2).astype(jnp.float32)
    mask_sub = (jax.random.uniform(ks, (B, H, L, L)) < 0.1).astype(jnp.float32)
    mask_causal = jnp.broadcast_to(
        jnp.triu(jnp.ones((L, L), jnp.float32), k=1)[None, None], (B, H, L, L))
    decay_coef = jax.random.uniform(kd, (B, H, L, L), minval=0.5, maxval=1.0,
                                    dtype=jnp.float32)

    out, attn = scaled_dot_product_attention(
        q, k, v, mask_pad, mask_sub, decay_coef, temperature,
        compute_dtype=compute_dtype, attn_dtype=attn_dtype, q_block=q_block)
    jax.block_until_ready((out, attn))

    ref_out, ref_attn = _reference(
        q, k, v, jnp.broadcast_to(mask_pad, (B, H, L, L)), mask_sub,
        mask_causal, decay_coef, temperature)

    # Tolerances accommodate bf16 compute/storage in the kernel and the TPU's
    # default (bf16) matmul precision in the pure-JAX reference, while still
    # catching any structural / masking / indexing error (those are O(0.1+)).
    assert bool(jnp.allclose(out.astype(jnp.float32), ref_out,
                             atol=atol, rtol=rtol)), "output mismatch"
    assert bool(jnp.allclose(attn.astype(jnp.float32), ref_attn,
                             atol=atol, rtol=rtol)), "attn mismatch"

    if check_no_attn:
        out_only = scaled_dot_product_attention(
            q, k, v, mask_pad, mask_sub, decay_coef, temperature,
            compute_dtype=compute_dtype, attn_dtype=attn_dtype,
            q_block=q_block, return_attn=False)
        jax.block_until_ready(out_only)
        assert bool(jnp.allclose(out_only.astype(jnp.float32), ref_out,
                                 atol=atol, rtol=rtol)), \
            "output mismatch (return_attn=False)"


if __name__ == "__main__":
    key = jax.random.PRNGKey(0)
    k1, k2 = jax.random.split(key)
    # Small shape, single query tile per head, f32 compute path, plus the
    # attn-less fast path.
    _run_case(k1, B=2, H=2, L=8, Dk=16, Dv=16,
              compute_dtype=None, attn_dtype=jnp.float32, q_block=256,
              atol=2e-2, rtol=2e-2, check_no_attn=True)
    # Larger shape exercising the Lq tiling path (grid = (B*H, 2)) and the
    # default bf16 compute / bf16 attn fast path.
    _run_case(k2, B=1, H=2, L=256, Dk=64, Dv=64,
              compute_dtype=jnp.bfloat16, attn_dtype=jnp.bfloat16, q_block=128,
              atol=3e-2, rtol=3e-2)
    print("KERNEL_OK")
</pallas_src>

<mosaic_0001>
module attributes {stable_mosaic.version = 11 : i64} {
  func.func @_sdpa_kernel(%arg0: i32, %arg1: i32, %arg2: memref<1x8x16xf32, #tpu.memory_space<vmem>>, %arg3: memref<1x8x16xf32, #tpu.memory_space<vmem>>, %arg4: memref<1x8x16xf32, #tpu.memory_space<vmem>>, %arg5: memref<1x1x8xf32, #tpu.memory_space<vmem>>, %arg6: memref<1x8x8xf32, #tpu.memory_space<vmem>>, %arg7: memref<1x8x8xf32, #tpu.memory_space<vmem>>, %arg8: memref<1x8x16xf32, #tpu.memory_space<vmem>>, %arg9: memref<1x8x8xf32, #tpu.memory_space<vmem>>) attributes {dimension_semantics = [#tpu.dimension_semantics<parallel>, #tpu.dimension_semantics<parallel>], iteration_bounds = array<i64: 4, 1>, scalar_prefetch = 0 : i64, scratch_operands = 0 : i64, tpu.core_type = #tpu.core_type<tc>, window_params = [{transform_indices = @transform_0, window_bounds = array<i64: 1, 8, 16>}, {transform_indices = @transform_1, window_bounds = array<i64: 1, 8, 16>}, {transform_indices = @transform_2, window_bounds = array<i64: 1, 8, 16>}, {transform_indices = @transform_3, window_bounds = array<i64: 1, 1, 8>}, {transform_indices = @transform_4, window_bounds = array<i64: 1, 8, 8>}, {transform_indices = @transform_5, window_bounds = array<i64: 1, 8, 8>}, {transform_indices = @transform_6, window_bounds = array<i64: 1, 8, 16>}, {transform_indices = @transform_7, window_bounds = array<i64: 1, 8, 8>}]} {
    %c0 = arith.constant 0 : index
    %c0_0 = arith.constant 0 : index
    %c0_1 = arith.constant 0 : index
    %0 = vector.load %arg2[%c0, %c0_0, %c0_1] : memref<1x8x16xf32, #tpu.memory_space<vmem>>, vector<1x8x16xf32>
    %1 = vector.shape_cast %0 : vector<1x8x16xf32> to vector<8x16xf32>
    %cst = arith.constant 2.500000e-01 : f32
    %2 = vector.broadcast %cst : f32 to vector<8x16xf32>
    %3 = arith.mulf %1, %2 : vector<8x16xf32>
    %c0_2 = arith.constant 0 : index
    %c0_3 = arith.constant 0 : index
    %c0_4 = arith.constant 0 : index
    %4 = vector.load %arg3[%c0_2, %c0_3, %c0_4] : memref<1x8x16xf32, #tpu.memory_space<vmem>>, vector<1x8x16xf32>
    %5 = vector.shape_cast %4 : vector<1x8x16xf32> to vector<8x16xf32>
    %c0_5 = arith.constant 0 : index
    %c0_6 = arith.constant 0 : index
    %c0_7 = arith.constant 0 : index
    %6 = vector.load %arg4[%c0_5, %c0_6, %c0_7] : memref<1x8x16xf32, #tpu.memory_space<vmem>>, vector<1x8x16xf32>
    %7 = vector.shape_cast %6 : vector<1x8x16xf32> to vector<8x16xf32>
    %cst_8 = arith.constant dense<0.000000e+00> : vector<8x8xf32>
    %8 = tpu.matmul %3, %5, %cst_8 {dimension_numbers = #tpu.dot_dimension_numbers<[1], [1], [0], [0], [0, 0, 1, 0], [], []>} : vector<8x16xf32>, vector<8x16xf32>, vector<8x8xf32> -> vector<8x8xf32>
    %cst_9 = arith.constant dense<0xFF800000> : vector<8xf32>
    %9 = vector.multi_reduction <maximumf>, %8, %cst_9 [1] : vector<8x8xf32> to vector<8xf32>
    %10 = vector.shape_cast %9 : vector<8xf32> to vector<8x1xf32>
    %11 = vector.broadcast %10 : vector<8x1xf32> to vector<8x8xf32>
    %12 = arith.subf %8, %11 : vector<8x8xf32>
    %13 = math.exp %12 : vector<8x8xf32>
    %cst_10 = arith.constant dense<0.000000e+00> : vector<8xf32>
    %14 = vector.multi_reduction <add>, %13, %cst_10 [1] : vector<8x8xf32> to vector<8xf32>
    %15 = vector.shape_cast %14 : vector<8xf32> to vector<8x1xf32>
    %16 = vector.broadcast %15 : vector<8x1xf32> to vector<8x8xf32>
    %17 = arith.divf %13, %16 : vector<8x8xf32>
    %c0_11 = arith.constant 0 : index
    %c0_12 = arith.constant 0 : index
    %c0_13 = arith.constant 0 : index
    %18 = vector.load %arg5[%c0_11, %c0_12, %c0_13] : memref<1x1x8xf32, #tpu.memory_space<vmem>>, vector<1x1x8xf32>
    %19 = vector.shape_cast %18 : vector<1x1x8xf32> to vector<1x8xf32>
    %cst_14 = arith.constant 1.000000e+00 : f32
    %20 = vector.broadcast %cst_14 : f32 to vector<1x8xf32>
    %21 = arith.subf %20, %19 : vector<1x8xf32>
    %c0_15 = arith.constant 0 : index
    %c0_16 = arith.constant 0 : index
    %c0_17 = arith.constant 0 : index
    %22 = vector.load %arg6[%c0_15, %c0_16, %c0_17] : memref<1x8x8xf32, #tpu.memory_space<vmem>>, vector<1x8x8xf32>
    %23 = vector.shape_cast %22 : vector<1x8x8xf32> to vector<8x8xf32>
    %cst_18 = arith.constant 1.000000e+00 : f32
    %24 = vector.broadcast %cst_18 : f32 to vector<8x8xf32>
    %25 = arith.subf %24, %23 : vector<8x8xf32>
    %26 = vector.broadcast %21 : vector<1x8xf32> to vector<8x8xf32>
    %27 = arith.mulf %26, %25 : vector<8x8xf32>
    %c0_19 = arith.constant 0 : index
    %c0_20 = arith.constant 0 : index
    %c0_21 = arith.constant 0 : index
    %28 = vector.load %arg7[%c0_19, %c0_20, %c0_21] : memref<1x8x8xf32, #tpu.memory_space<vmem>>, vector<1x8x8xf32>
    %29 = vector.shape_cast %28 : vector<1x8x8xf32> to vector<8x8xf32>
    %30 = arith.mulf %27, %29 : vector<8x8xf32>
    %c8_i32 = arith.constant 8 : i32
    %31 = arith.muli %arg1, %c8_i32 : i32
    %32 = tpu.iota {dimensions = array<i32: 0>} : vector<8x8xi32>
    %33 = vector.broadcast %31 : i32 to vector<8x8xi32>
    %34 = arith.addi %32, %33 : vector<8x8xi32>
    %35 = tpu.iota {dimensions = array<i32: 1>} : vector<8x8xi32>
    %36 = arith.cmpi sle, %35, %34 : vector<8x8xi32>
    %37 = arith.mulf %17, %30 : vector<8x8xf32>
    %cst_22 = arith.constant 0.000000e+00 : f32
    %38 = vector.broadcast %cst_22 : f32 to vector<8x8xf32>
    %39 = arith.select %36, %37, %38 : vector<8x8xi1>, vector<8x8xf32>
    %c0_23 = arith.constant 0 : index
    %c0_24 = arith.constant 0 : index
    %c0_25 = arith.constant 0 : index
    %40 = vector.load %arg9[%c0_23, %c0_24, %c0_25] : memref<1x8x8xf32, #tpu.memory_space<vmem>>, vector<1x8x8xf32>
    %41 = vector.shape_cast %40 : vector<1x8x8xf32> to vector<8x8xf32>
    %42 = vector.shape_cast %39 : vector<8x8xf32> to vector<1x8x8xf32>
    tpu.vector_store %arg9[%c0_23, %c0_24, %c0_25], %42 {strides = array<i32>} : memref<1x8x8xf32, #tpu.memory_space<vmem>>, vector<1x8x8xf32>,
    %cst_26 = arith.constant dense<0.000000e+00> : vector<8x16xf32>
    %43 = tpu.matmul %39, %7, %cst_26 {dimension_numbers = #tpu.dot_dimension_numbers<[1], [0], [0], [1], [0, 0, 1, 1], [], []>} : vector<8x8xf32>, vector<8x16xf32>, vector<8x16xf32> -> vector<8x16xf32>
    %c0_27 = arith.constant 0 : index
    %c0_28 = arith.constant 0 : index
    %c0_29 = arith.constant 0 : index
    %44 = vector.load %arg8[%c0_27, %c0_28, %c0_29] : memref<1x8x16xf32, #tpu.memory_space<vmem>>, vector<1x8x16xf32>
    %45 = vector.shape_cast %44 : vector<1x8x16xf32> to vector<8x16xf32>
    %46 = vector.shape_cast %43 : vector<8x16xf32> to vector<1x8x16xf32>
    tpu.vector_store %arg8[%c0_27, %c0_28, %c0_29], %46 {strides = array<i32>} : memref<1x8x16xf32, #tpu.memory_space<vmem>>, vector<1x8x16xf32>,
    return
  }
  func.func @transform_0(%arg0: i32, %arg1: i32) -> (i32, i32, i32) {
    %c0_i32 = arith.constant 0 : i32
    %c0_i32_0 = arith.constant 0 : i32
    return %arg0, %arg1, %c0_i32 : i32, i32, i32
  }
  func.func @transform_1(%arg0: i32, %arg1: i32) -> (i32, i32, i32) {
    %c0_i32 = arith.constant 0 : i32
    %c0_i32_0 = arith.constant 0 : i32
    %c0_i32_1 = arith.constant 0 : i32
    return %arg0, %c0_i32, %c0_i32_0 : i32, i32, i32
  }
  func.func @transform_2(%arg0: i32, %arg1: i32) -> (i32, i32, i32) {
    %c0_i32 = arith.constant 0 : i32
    %c0_i32_0 = arith.constant 0 : i32
    %c0_i32_1 = arith.constant 0 : i32
    return %arg0, %c0_i32, %c0_i32_0 : i32, i32, i32
  }
  func.func @transform_3(%arg0: i32, %arg1: i32) -> (i32, i32, i32) {
    %c0_i32 = arith.constant 0 : i32
    %c0_i32_0 = arith.constant 0 : i32
    %c0_i32_1 = arith.constant 0 : i32
    return %arg0, %c0_i32, %c0_i32_0 : i32, i32, i32
  }
  func.func @transform_4(%arg0: i32, %arg1: i32) -> (i32, i32, i32) {
    %c0_i32 = arith.constant 0 : i32
    %c0_i32_0 = arith.constant 0 : i32
    return %arg0, %arg1, %c0_i32 : i32, i32, i32
  }
  func.func @transform_5(%arg0: i32, %arg1: i32) -> (i32, i32, i32) {
    %c0_i32 = arith.constant 0 : i32
    %c0_i32_0 = arith.constant 0 : i32
    return %arg0, %arg1, %c0_i32 : i32, i32, i32
  }
  func.func @transform_6(%arg0: i32, %arg1: i32) -> (i32, i32, i32) {
    %c0_i32 = arith.constant 0 : i32
    %c0_i32_0 = arith.constant 0 : i32
    return %arg0, %arg1, %c0_i32 : i32, i32, i32
  }
  func.func @transform_7(%arg0: i32, %arg1: i32) -> (i32, i32, i32) {
    %c0_i32 = arith.constant 0 : i32
    %c0_i32_0 = arith.constant 0 : i32
    return %arg0, %arg1, %c0_i32 : i32, i32, i32
  }
}

</mosaic_0001>

<llo_original>
// kernel: tpu_custom_call.1
$region0: #{tpu_custom_call.1}
  #allocation0 [shape = 'u32[]', space=smem, size = 0x4, offset = 0x4, fixed_abs, tag = 'smem constant byte address 0x4 - core index']
  #allocation1 [shape = 'u32[144,128]{1,0:T(1,128)}', space=vmem, size = 0x12000, scoped, tag = 'internal scratch']
  %s0 = inlined_call_operand.hbm [shape: f32[4,8,16], index: 0, kind: input, shape index: {}]
  %s1 = inlined_call_operand.hbm [shape: f32[4,8,16], index: 1, kind: input, shape index: {}]
  %s2 = inlined_call_operand.hbm [shape: f32[4,8,16], index: 2, kind: input, shape index: {}]
  %s3 = inlined_call_operand.vmem [shape: f32[4,1,8], index: 3, kind: input, shape index: {}]
  %s4 = inlined_call_operand.hbm [shape: f32[4,8,8], index: 4, kind: input, shape index: {}]
  %s5 = inlined_call_operand.hbm [shape: f32[4,8,8], index: 5, kind: input, shape index: {}]
  %s6 = inlined_call_operand.hbm [shape: f32[4,8,16], index: 6, kind: output, shape index: {0}]
  %s7 = inlined_call_operand.hbm [shape: f32[4,8,8], index: 7, kind: output, shape index: {1}]
  %8 = xla_tuple %s6, %s7
  %s9 = sld [smem:[#allocation0]]
  $region85: #{tpu_custom_call.1} parent=0
    _
  %s11 = ssub.s32 1, %s9
  %s12 = scalar_select 0, %s11, %s9
  $region1: #{tpu_custom_call.1} parent=0
    #allocation2 [shape = 'u8[8192]{0}', space=vmem, size = 0x2000, scoped, tag = 'input window, operand 0']
    #allocation3 [shape = 's32[2]{0}', space=sflag, size = 0x8, scoped, tag = 'scoped memory for tpu_custom_call.1']
    #allocation4 [shape = 's32[2]{0}', space=sflag, size = 0x8, scoped, tag = 'scoped memory for tpu_custom_call.1']
    #allocation5 [shape = 'u8[8192]{0}', space=vmem, size = 0x2000, scoped, tag = 'input window, operand 1']
    #allocation6 [shape = 's32[2]{0}', space=sflag, size = 0x8, scoped, tag = 'scoped memory for tpu_custom_call.1']
    #allocation7 [shape = 'u8[8192]{0}', space=vmem, size = 0x2000, scoped, tag = 'input window, operand 2']
    #allocation8 [shape = 'u8[8192]{0}', space=vmem, size = 0x2000, scoped, tag = 'input window, operand 4']
    #allocation9 [shape = 's32[2]{0}', space=sflag, size = 0x8, scoped, tag = 'scoped memory for tpu_custom_call.1']
    #allocation10 [shape = 'u8[8192]{0}', space=vmem, size = 0x2000, scoped, tag = 'input window, operand 5']
    #allocation11 [shape = 'u8[8192]{0}', space=vmem, size = 0x2000, scoped, tag = 'output window, operand 0']
    #allocation12 [shape = 'u8[8192]{0}', space=vmem, size = 0x2000, scoped, tag = 'output window, operand 1']
    #allocation13 [shape = 's32[2]{0}', space=sflag, size = 0x8, scoped, tag = 'scoped memory for tpu_custom_call.1']
    %13 = vsyncpa [#allocation3], 0
    %s14 = scalar_lea.sflag [#allocation3], 1
    %15 = vsyncpa %s14, 0
    %16 = vsyncpa [#allocation6], 0
    %s17 = scalar_lea.sflag [#allocation6], 1
    %18 = vsyncpa %s17, 0
    %19 = vsyncpa [#allocation9], 0
    %s20 = scalar_lea.sflag [#allocation9], 1
    %21 = vsyncpa %s20, 0
    %22 = vsyncpa [#allocation4], 0
    %s23 = scalar_lea.sflag [#allocation4], 1
    %24 = vsyncpa %s23, 0
    %25 = vsyncpa [#allocation13], 0
    %s26 = scalar_lea.sflag [#allocation13], 1
    %27 = vsyncpa %s26, 0
    loop: start=0, step=1, limit=6
    $region2: #{tpu_custom_call.1} parent=1 // loop_pre_header
      _
    $region3: #{tpu_custom_call.1} parent=1 // loop_header
      %s29 = sphi 0, %s33
      %p30 = scmp.ge.s32.totalorder %s29, 6
      %s36 = sphi 0, %s48
      %s37 = sphi 0, %s44
      %s38 = sphi 0, %s36
      %s39 = sphi 0, %s37
      %s40 = sphi 0, %s38
      %s41 = sphi 0, %s39
      %s53 = sphi 0, %s55
      %s56 = sphi 0, %s53
      %s57 = sphi 0, %s56
      %s73 = sphi 0, %s57
      %s79 = sphi 0, %s81
      %s82 = sphi 0, %s79
      %s83 = sphi 0, %s82
      %s99 = sphi 0, %s83
      %s105 = sphi 0, %s107
      %s108 = sphi 0, %s105
      %s109 = sphi 0, %s108
      %s125 = sphi 0, %s109
      %s131 = sphi 0, %s133
      %s134 = sphi 0, %s131
      %s135 = sphi 0, %s134
      %s151 = sphi 0, %s135
      %s159 = sphi 0, %s161
      %s162 = sphi 0, %s159
      %s163 = sphi 0, %s162
      %s179 = sphi 0, %s163
      %s187 = sphi 0, %s189
      %s190 = sphi 0, %s187
      %s191 = sphi 0, %s190
      %s207 = sphi 0, %s191
      %s215 = sphi 0, %s217
      %s218 = sphi 0, %s215
      %s219 = sphi 0, %s218
      %s235 = sphi 0, %s219
      %s243 = sphi 0, %s245
      %s246 = sphi 0, %s243
      %s247 = sphi 0, %s246
      %s263 = sphi 0, %s247
    $region4: #{tpu_custom_call.1} parent=1 // loop_header_branch
      %32 = sbr.rel (%p30) target = $region8
    $region5: #{tpu_custom_call.1} parent=1 // loop_body
      %s34 = ssub.s32 %s29, 1
      %s35 = ssub.s32 %s29, 2
      %s42 = sadd.s32 1, %s37
      %p43 = scmp.ge.s32.totalorder %s42, 1
      %s44 = scalar_select %p43, 0, %s42
      %s45 = sadd.s32 1, %s36
      %s46 = scalar_select %p43, %s45, %s36
      %p47 = scmp.ge.s32.totalorder %s46, 4
      %s48 = scalar_select %p47, 0, %s46
      %s49 = ssub.s32 %s36, %s48
      %s50 = ssub.s32 %s37, %s44
      %s51 = sor.u32 %s49, %s50
      %p52 = scmp.eq.s32.totalorder %s51, 0
      %s54 = sadd.s32 %s53, 1
      %s55 = scalar_select %p52, %s53, %s54
      %p58 = pneg %p52
      %p59 = scmp.eq.s32.totalorder %s29, 3
      %p60 = por %p58, %p59
      %p61 = scmp.ne.s32.totalorder %s53, %s56
      %p62 = scmp.eq.s32.totalorder %s29, 0
      %p63 = por %p61, %p62
      %p64 = scmp.ne.s32.totalorder %s53, %s56
      %p65 = scmp.eq.s32.totalorder %s34, 3
      %p66 = por %p64, %p65
      %p67 = scmp.ne.s32.totalorder %s56, %s57
      %p68 = scmp.eq.s32.totalorder %s34, 0
      %p69 = por %p67, %p68
      %p70 = scmp.ne.s32.totalorder %s56, %s57
      %p71 = scmp.eq.s32.totalorder %s35, 3
      %p72 = por %p70, %p71
      %p74 = scmp.ne.s32.totalorder %s57, %s73
      %p75 = scmp.eq.s32.totalorder %s35, 0
      %p76 = por %p74, %p75
      %s77 = ssub.s32 %s36, %s48
      %p78 = scmp.eq.s32.totalorder %s77, 0
      %s80 = sadd.s32 %s79, 1
      %s81 = scalar_select %p78, %s79, %s80
      %p84 = pneg %p78
      %p85 = scmp.eq.s32.totalorder %s29, 3
      %p86 = por %p84, %p85
      %p87 = scmp.ne.s32.totalorder %s79, %s82
      %p88 = scmp.eq.s32.totalorder %s29, 0
      %p89 = por %p87, %p88
      %p90 = scmp.ne.s32.totalorder %s79, %s82
      %p91 = scmp.eq.s32.totalorder %s34, 3
      %p92 = por %p90, %p91
      %p93 = scmp.ne.s32.totalorder %s82, %s83
      %p94 = scmp.eq.s32.totalorder %s34, 0
      %p95 = por %p93, %p94
      %p96 = scmp.ne.s32.totalorder %s82, %s83
      %p97 = scmp.eq.s32.totalorder %s35, 3
      %p98 = por %p96, %p97
      %p100 = scmp.ne.s32.totalorder %s83, %s99
      %p101 = scmp.eq.s32.totalorder %s35, 0
      %p102 = por %p100, %p101
      %s103 = ssub.s32 %s36, %s48
      %p104 = scmp.eq.s32.totalorder %s103, 0
      %s106 = sadd.s32 %s105, 1
      %s107 = scalar_select %p104, %s105, %s106
      %p110 = pneg %p104
      %p111 = scmp.eq.s32.totalorder %s29, 3
      %p112 = por %p110, %p111
      %p113 = scmp.ne.s32.totalorder %s105, %s108
      %p114 = scmp.eq.s32.totalorder %s29, 0
      %p115 = por %p113, %p114
      %p116 = scmp.ne.s32.totalorder %s105, %s108
      %p117 = scmp.eq.s32.totalorder %s34, 3
      %p118 = por %p116, %p117
      %p119 = scmp.ne.s32.totalorder %s108, %s109
      %p120 = scmp.eq.s32.totalorder %s34, 0
      %p121 = por %p119, %p120
      %p122 = scmp.ne.s32.totalorder %s108, %s109
      %p123 = scmp.eq.s32.totalorder %s35, 3
      %p124 = por %p122, %p123
      %p126 = scmp.ne.s32.totalorder %s109, %s125
      %p127 = scmp.eq.s32.totalorder %s35, 0
      %p128 = por %p126, %p127
      %s129 = ssub.s32 %s36, %s48
      %p130 = scmp.eq.s32.totalorder %s129, 0
      %s132 = sadd.s32 %s131, 1
      %s133 = scalar_select %p130, %s131, %s132
      %p136 = pneg %p130
      %p137 = scmp.eq.s32.totalorder %s29, 3
      %p138 = por %p136, %p137
      %p139 = scmp.ne.s32.totalorder %s131, %s134
      %p140 = scmp.eq.s32.totalorder %s29, 0
      %p141 = por %p139, %p140
      %p142 = scmp.ne.s32.totalorder %s131, %s134
      %p143 = scmp.eq.s32.totalorder %s34, 3
      %p144 = por %p142, %p143
      %p145 = scmp.ne.s32.totalorder %s134, %s135
      %p146 = scmp.eq.s32.totalorder %s34, 0
      %p147 = por %p145, %p146
      %p148 = scmp.ne.s32.totalorder %s134, %s135
      %p149 = scmp.eq.s32.totalorder %s35, 3
      %p150 = por %p148, %p149
      %p152 = scmp.ne.s32.totalorder %s135, %s151
      %p153 = scmp.eq.s32.totalorder %s35, 0
      %p154 = por %p152, %p153
      %s155 = ssub.s32 %s36, %s48
      %s156 = ssub.s32 %s37, %s44
      %s157 = sor.u32 %s155, %s156
      %p158 = scmp.eq.s32.totalorder %s157, 0
      %s160 = sadd.s32 %s159, 1
      %s161 = scalar_select %p158, %s159, %s160
      %p164 = pneg %p158
      %p165 = scmp.eq.s32.totalorder %s29, 3
      %p166 = por %p164, %p165
      %p167 = scmp.ne.s32.totalorder %s159, %s162
      %p168 = scmp.eq.s32.totalorder %s29, 0
      %p169 = por %p167, %p168
      %p170 = scmp.ne.s32.totalorder %s159, %s162
      %p171 = scmp.eq.s32.totalorder %s34, 3
      %p172 = por %p170, %p171
      %p173 = scmp.ne.s32.totalorder %s162, %s163
      %p174 = scmp.eq.s32.totalorder %s34, 0
      %p175 = por %p173, %p174
      %p176 = scmp.ne.s32.totalorder %s162, %s163
      %p177 = scmp.eq.s32.totalorder %s35, 3
      %p178 = por %p176, %p177
      %p180 = scmp.ne.s32.totalorder %s163, %s179
      %p181 = scmp.eq.s32.totalorder %s35, 0
      %p182 = por %p180, %p181
      %s183 = ssub.s32 %s36, %s48
      %s184 = ssub.s32 %s37, %s44
      %s185 = sor.u32 %s183, %s184
      %p186 = scmp.eq.s32.totalorder %s185, 0
      %s188 = sadd.s32 %s187, 1
      %s189 = scalar_select %p186, %s187, %s188
      %p192 = pneg %p186
      %p193 = scmp.eq.s32.totalorder %s29, 3
      %p194 = por %p192, %p193
      %p195 = scmp.ne.s32.totalorder %s187, %s190
      %p196 = scmp.eq.s32.totalorder %s29, 0
      %p197 = por %p195, %p196
      %p198 = scmp.ne.s32.totalorder %s187, %s190
      %p199 = scmp.eq.s32.totalorder %s34, 3
      %p200 = por %p198, %p199
      %p201 = scmp.ne.s32.totalorder %s190, %s191
      %p202 = scmp.eq.s32.totalorder %s34, 0
      %p203 = por %p201, %p202
      %p204 = scmp.ne.s32.totalorder %s190, %s191
      %p205 = scmp.eq.s32.totalorder %s35, 3
      %p206 = por %p204, %p205
      %p208 = scmp.ne.s32.totalorder %s191, %s207
      %p209 = scmp.eq.s32.totalorder %s35, 0
      %p210 = por %p208, %p209
      %s211 = ssub.s32 %s36, %s48
      %s212 = ssub.s32 %s37, %s44
      %s213 = sor.u32 %s211, %s212
      %p214 = scmp.eq.s32.totalorder %s213, 0
      %s216 = sadd.s32 %s215, 1
      %s217 = scalar_select %p214, %s215, %s216
      %p220 = pneg %p214
      %p221 = scmp.eq.s32.totalorder %s29, 3
      %p222 = por %p220, %p221
      %p223 = scmp.ne.s32.totalorder %s215, %s218
      %p224 = scmp.eq.s32.totalorder %s29, 0
      %p225 = por %p223, %p224
      %p226 = scmp.ne.s32.totalorder %s215, %s218
      %p227 = scmp.eq.s32.totalorder %s34, 3
      %p228 = por %p226, %p227
      %p229 = scmp.ne.s32.totalorder %s218, %s219
      %p230 = scmp.eq.s32.totalorder %s34, 0
      %p231 = por %p229, %p230
      %p232 = scmp.ne.s32.totalorder %s218, %s219
      %p233 = scmp.eq.s32.totalorder %s35, 3
      %p234 = por %p232, %p233
      %p236 = scmp.ne.s32.totalorder %s219, %s235
      %p237 = scmp.eq.s32.totalorder %s35, 0
      %p238 = por %p236, %p237
      %s239 = ssub.s32 %s36, %s48
      %s240 = ssub.s32 %s37, %s44
      %s241 = sor.u32 %s239, %s240
      %p242 = scmp.eq.s32.totalorder %s241, 0
      %s244 = sadd.s32 %s243, 1
      %s245 = scalar_select %p242, %s243, %s244
      %p248 = pneg %p242
      %p249 = scmp.eq.s32.totalorder %s29, 3
      %p250 = por %p248, %p249
      %p251 = scmp.ne.s32.totalorder %s243, %s246
      %p252 = scmp.eq.s32.totalorder %s29, 0
      %p253 = por %p251, %p252
      %p254 = scmp.ne.s32.totalorder %s243, %s246
      %p255 = scmp.eq.s32.totalorder %s34, 3
      %p256 = por %p254, %p255
      %p257 = scmp.ne.s32.totalorder %s246, %s247
      %p258 = scmp.eq.s32.totalorder %s34, 0
      %p259 = por %p257, %p258
      %p260 = scmp.ne.s32.totalorder %s246, %s247
      %p261 = scmp.eq.s32.totalorder %s35, 3
      %p262 = por %p260, %p261
      %p264 = scmp.ne.s32.totalorder %s247, %s263
      %p265 = scmp.eq.s32.totalorder %s35, 0
      %p266 = por %p264, %p265
      %p267 = scmp.le.s32.totalorder 1, %s29
      %p268 = scmp.lt.s32.totalorder %s29, 5
      %p269 = pnand %p267, %p268
      %p270 = pneg %p269
      // Predicated region
      $region9: #{tpu_custom_call.1} parent=5 // pred_check
        _
      $region10: #{tpu_custom_call.1} parent=5 // pred_check_branch
        %272 = sbr.rel (%p269) target = $region12
      $region11: #{tpu_custom_call.1} parent=5 // pred_region
        %s273 = ssub.s32 %s29, 1
      $region12: #{tpu_custom_call.1} parent=5 // pred_fallthru
        _
      %p274 = scmp.lt.s32.totalorder %s29, 4
      // Predicated region
      $region13: #{tpu_custom_call.1} parent=5 // pred_check
        %p275 = pneg %p274
      $region14: #{tpu_custom_call.1} parent=5 // pred_check_branch
        %277 = sbr.rel (%p275) target = $region16
      $region15: #{tpu_custom_call.1} parent=5 // pred_region
        // Predicated region
        $region17: #{tpu_custom_call.1} parent=15 // pred_check
          %p278 = pneg %p63
        $region18: #{tpu_custom_call.1} parent=15 // pred_check_branch
          %280 = sbr.rel (%p278) target = $region20
        $region19: #{tpu_custom_call.1} parent=15 // pred_region
          %s281 = sand.u32 %s53, 1
          %s282 = scalar_lea.sflag [#allocation3], %s281
          %s283 = sand.u32 %s53, 1
          %s284 = smul.addr %s283, 8
          %s285 = scalar_lea.vmem [#allocation2], %s284
          %s287 = ssub.s32 128, 128
          %288 = vsyncadd %s282, %s287
          %s289 = sadd.s32 %s37, %s36
          %s290 = smul.addr %s289, 128
          %s291 = scalar_lea.hbm %s0, %s290
          %s293 = sshll.u32 %s285, 4
          %s294 = int_to_ptr.vmem [resolvable:$true] %s293
          %296 = dma.hbm_to_vmem [thread:$0]  %s291, 128, %s294, %s282
        $region20: #{tpu_custom_call.1} parent=15 // pred_fallthru
          _
        // Predicated region
        $region21: #{tpu_custom_call.1} parent=15 // pred_check
          %p297 = pneg %p89
        $region22: #{tpu_custom_call.1} parent=15 // pred_check_branch
          %299 = sbr.rel (%p297) target = $region24
        $region23: #{tpu_custom_call.1} parent=15 // pred_region
          %s300 = sand.u32 %s29, 1
          %s301 = scalar_lea.sflag [#allocation6], %s300
          %s302 = sand.u32 %s79, 1
          %s303 = smul.addr %s302, 8
          %s304 = scalar_lea.vmem [#allocation5], %s303
          %s306 = ssub.s32 128, 128
          %307 = vsyncadd %s301, %s306
          %s308 = smul.addr %s36, 128
          %s309 = scalar_lea.hbm %s1, %s308
          %s311 = sshll.u32 %s304, 4
          %s312 = int_to_ptr.vmem [resolvable:$true] %s311
          %314 = dma.hbm_to_vmem [thread:$0]  %s309, 128, %s312, %s301
        $region24: #{tpu_custom_call.1} parent=15 // pred_fallthru
          _
        // Predicated region
        $region25: #{tpu_custom_call.1} parent=15 // pred_check
          %p315 = pneg %p115
        $region26: #{tpu_custom_call.1} parent=15 // pred_check_branch
          %317 = sbr.rel (%p315) target = $region28
        $region27: #{tpu_custom_call.1} parent=15 // pred_region
          %s318 = sand.u32 %s29, 1
          %s319 = scalar_lea.sflag [#allocation6], %s318
          %s320 = sand.u32 %s105, 1
          %s321 = smul.addr %s320, 8
          %s322 = scalar_lea.vmem [#allocation7], %s321
          %s324 = ssub.s32 128, 128
          %325 = vsyncadd %s319, %s324
          %s326 = smul.addr %s36, 128
          %s327 = scalar_lea.hbm %s2, %s326
          %s329 = sshll.u32 %s322, 4
          %s330 = int_to_ptr.vmem [resolvable:$true] %s329
          %332 = dma.hbm_to_vmem [thread:$0]  %s327, 128, %s330, %s319
        $region28: #{tpu_custom_call.1} parent=15 // pred_fallthru
          _
        // Predicated region
        $region29: #{tpu_custom_call.1} parent=15 // pred_check
          %p333 = pneg %p141
        $region30: #{tpu_custom_call.1} parent=15 // pred_check_branch
          %335 = sbr.rel (%p333) target = $region32
        $region31: #{tpu_custom_call.1} parent=15 // pred_region
          %p336 = scmp.lt.s32.totalorder %s36, 3
          %s337 = scalar_select %p336, %s36, 3
          %s338 = scalar_lea.vmem %s3, %s337
        $region32: #{tpu_custom_call.1} parent=15 // pred_fallthru
          _
        // Predicated region
        $region33: #{tpu_custom_call.1} parent=15 // pred_check
          %p339 = pneg %p169
        $region34: #{tpu_custom_call.1} parent=15 // pred_check_branch
          %341 = sbr.rel (%p339) target = $region36
        $region35: #{tpu_custom_call.1} parent=15 // pred_region
          %s342 = sand.u32 %s29, 1
          %s343 = scalar_lea.sflag [#allocation9], %s342
          %s344 = sand.u32 %s159, 1
          %s345 = smul.addr %s344, 8
          %s346 = scalar_lea.vmem [#allocation8], %s345
          %s348 = ssub.s32 128, 128
          %349 = vsyncadd %s343, %s348
          %s350 = sadd.s32 %s37, %s36
          %s351 = smul.addr %s350, 128
          %s352 = scalar_lea.hbm %s4, %s351
          %s354 = sshll.u32 %s346, 4
          %s355 = int_to_ptr.vmem [resolvable:$true] %s354
          %357 = dma.hbm_to_vmem [thread:$0]  %s352, 128, %s355, %s343
        $region36: #{tpu_custom_call.1} parent=15 // pred_fallthru
          _
        // Predicated region
        $region37: #{tpu_custom_call.1} parent=15 // pred_check
          %p358 = pneg %p197
        $region38: #{tpu_custom_call.1} parent=15 // pred_check_branch
          %360 = sbr.rel (%p358) target = $region40
        $region39: #{tpu_custom_call.1} parent=15 // pred_region
          %s361 = sand.u32 %s29, 1
          %s362 = scalar_lea.sflag [#allocation9], %s361
          %s363 = sand.u32 %s187, 1
          %s364 = smul.addr %s363, 8
          %s365 = scalar_lea.vmem [#allocation10], %s364
          %s367 = ssub.s32 128, 128
          %368 = vsyncadd %s362, %s367
          %s369 = sadd.s32 %s37, %s36
          %s370 = smul.addr %s369, 128
          %s371 = scalar_lea.hbm %s5, %s370
          %s373 = sshll.u32 %s365, 4
          %s374 = int_to_ptr.vmem [resolvable:$true] %s373
          %376 = dma.hbm_to_vmem [thread:$0]  %s371, 128, %s374, %s362
        $region40: #{tpu_custom_call.1} parent=15 // pred_fallthru
          _
      $region16: #{tpu_custom_call.1} parent=5 // pred_fallthru
        _
      %p377 = scmp.le.s32.totalorder 1, %s29
      %p378 = scmp.lt.s32.totalorder %s29, 5
      %p379 = pnand %p377, %p378
      %p380 = pneg %p379
      // Predicated region
      $region41: #{tpu_custom_call.1} parent=5 // pred_check
        _
      $region42: #{tpu_custom_call.1} parent=5 // pred_check_branch
        %382 = sbr.rel (%p379) target = $region44
      $region43: #{tpu_custom_call.1} parent=5 // pred_region
        %s383 = ssub.s32 %s29, 1
        %s384 = sand.u32 %s56, 1
        %s385 = scalar_lea.sflag [#allocation3], %s384
        %s386 = sand.u32 %s56, 1
        %s387 = smul.addr %s386, 8
        %s388 = scalar_lea.vmem [#allocation2], %s387
        // Predicated region
        $region45: #{tpu_custom_call.1} parent=43 // pred_check
          %p389 = pneg %p69
        $region46: #{tpu_custom_call.1} parent=43 // pred_check_branch
          %391 = sbr.rel (%p389) target = $region48
        $region47: #{tpu_custom_call.1} parent=43 // pred_region
          %392 = dma.done %s385, 128
        $region48: #{tpu_custom_call.1} parent=43 // pred_fallthru
          _
        %s393 = sand.u32 %s34, 1
        %s394 = scalar_lea.sflag [#allocation6], %s393
        %s395 = sand.u32 %s82, 1
        %s396 = smul.addr %s395, 8
        %s397 = scalar_lea.vmem [#allocation5], %s396
        // Predicated region
        $region49: #{tpu_custom_call.1} parent=43 // pred_check
          %p398 = pneg %p95
        $region50: #{tpu_custom_call.1} parent=43 // pred_check_branch
          %400 = sbr.rel (%p398) target = $region52
        $region51: #{tpu_custom_call.1} parent=43 // pred_region
          %401 = dma.done %s394, 128
        $region52: #{tpu_custom_call.1} parent=43 // pred_fallthru
          _
        %s402 = sand.u32 %s34, 1
        %s403 = scalar_lea.sflag [#allocation6], %s402
        %s404 = sand.u32 %s108, 1
        %s405 = smul.addr %s404, 8
        %s406 = scalar_lea.vmem [#allocation7], %s405
        // Predicated region
        $region53: #{tpu_custom_call.1} parent=43 // pred_check
          %p407 = pneg %p121
        $region54: #{tpu_custom_call.1} parent=43 // pred_check_branch
          %409 = sbr.rel (%p407) target = $region56
        $region55: #{tpu_custom_call.1} parent=43 // pred_region
          %410 = dma.done %s403, 128
        $region56: #{tpu_custom_call.1} parent=43 // pred_fallthru
          _
        %s411 = sand.u32 %s34, 1
        %s412 = scalar_lea.sflag [#allocation9], %s411
        %s413 = sand.u32 %s162, 1
        %s414 = smul.addr %s413, 8
        %s415 = scalar_lea.vmem [#allocation8], %s414
        // Predicated region
        $region57: #{tpu_custom_call.1} parent=43 // pred_check
          %p416 = pneg %p175
        $region58: #{tpu_custom_call.1} parent=43 // pred_check_branch
          %418 = sbr.rel (%p416) target = $region60
        $region59: #{tpu_custom_call.1} parent=43 // pred_region
          %419 = dma.done %s412, 128
        $region60: #{tpu_custom_call.1} parent=43 // pred_fallthru
          _
        %s420 = sand.u32 %s34, 1
        %s421 = scalar_lea.sflag [#allocation9], %s420
        %s422 = sand.u32 %s190, 1
        %s423 = smul.addr %s422, 8
        %s424 = scalar_lea.vmem [#allocation10], %s423
        // Predicated region
        $region61: #{tpu_custom_call.1} parent=43 // pred_check
          %p425 = pneg %p203
        $region62: #{tpu_custom_call.1} parent=43 // pred_check_branch
          %427 = sbr.rel (%p425) target = $region64
        $region63: #{tpu_custom_call.1} parent=43 // pred_region
          %428 = dma.done %s421, 128
        $region64: #{tpu_custom_call.1} parent=43 // pred_fallthru
          _
        %s429 = sand.u32 %s56, 1
        %s430 = scalar_lea.sflag [#allocation3], %s429
        %s431 = sand.u32 %s56, 1
        %s432 = smul.addr %s431, 8
        %s433 = scalar_lea.vmem [#allocation2], %s432
        %p434 = pneg %p69
        %p435 = pneg %p66
        %s436 = sand.u32 %s34, 1
        %s437 = scalar_lea.sflag [#allocation6], %s436
        %s438 = sand.u32 %s82, 1
        %s439 = smul.addr %s438, 8
        %s440 = scalar_lea.vmem [#allocation5], %s439
        %p441 = pneg %p95
        %p442 = pneg %p92
        %s443 = sand.u32 %s34, 1
        %s444 = scalar_lea.sflag [#allocation6], %s443
        %s445 = sand.u32 %s108, 1
        %s446 = smul.addr %s445, 8
        %s447 = scalar_lea.vmem [#allocation7], %s446
        %p448 = pneg %p121
        %p449 = pneg %p118
        %p450 = scmp.lt.s32.totalorder %s38, 3
        %s451 = scalar_select %p450, %s38, 3
        %s452 = scalar_lea.vmem %s3, %s451
        %p453 = pneg %p147
        %p454 = pneg %p144
        %s455 = sand.u32 %s34, 1
        %s456 = scalar_lea.sflag [#allocation9], %s455
        %s457 = sand.u32 %s162, 1
        %s458 = smul.addr %s457, 8
        %s459 = scalar_lea.vmem [#allocation8], %s458
        %p460 = pneg %p175
        %p461 = pneg %p172
        %s462 = sand.u32 %s34, 1
        %s463 = scalar_lea.sflag [#allocation9], %s462
        %s464 = sand.u32 %s190, 1
        %s465 = smul.addr %s464, 8
        %s466 = scalar_lea.vmem [#allocation10], %s465
        %p467 = pneg %p203
        %p468 = pneg %p200
        %p469 = pneg %p231
        %p470 = pneg %p228
        %s471 = sand.u32 %s218, 1
        %s472 = scalar_lea.sflag [#allocation4], %s471
        %s473 = sand.u32 %s218, 1
        %s474 = smul.addr %s473, 8
        %s475 = scalar_lea.vmem [#allocation11], %s474
        %p476 = pneg %p259
        %p477 = pneg %p256
        %s478 = sand.u32 %s246, 1
        %s479 = scalar_lea.sflag [#allocation13], %s478
        %s480 = sand.u32 %s246, 1
        %s481 = smul.addr %s480, 8
        %s482 = scalar_lea.vmem [#allocation12], %s481
        %p483 = scmp.lt.s32.totalorder %s38, 3
        %s484 = scalar_select %p483, %s38, 3
        %s485 = scalar_lea.vmem %s3, %s484
        %v486 = vld [vmem:[%s388] sm:$0xff]
        %v487 = vmul.f32 %v486, 0.25
        %v488 = vld [vmem:[%s397] sm:$0xff]
        %v489 = vld [vmem:[%s406] sm:$0xff]
        %vm490 = vcmask 130048
        %v492 = vsel %vm490, %v487, 0
        %v495 = vsel %vm490, %v488, 0
        %497 = vmatprep.subr.mxu0 0.0
        %498 = vmatpush1.xpose.msra.mxu0 %v495
        %499 = vmatprep.subr.mxu0 0.0
        %500 = vmatpush1.xpose.msra.mxu0 0.0
        %501 = vmatprep.subr.mxu0 0.0
        %502 = vmatpush1.xpose.msra.mxu0 0.0
        %503 = vmatprep.subr.mxu0 0.0
        %504 = vmatpush1.xpose.msra.mxu0 0.0
        %505 = vmatprep.subr.mxu0 0.0
        %506 = vmatpush1.xpose.msra.mxu0 0.0
        %507 = vmatprep.subr.mxu0 0.0
        %508 = vmatpush1.xpose.msra.mxu0 0.0
        %509 = vmatprep.subr.mxu0 0.0
        %510 = vmatpush1.xpose.msra.mxu0 0.0
        %511 = vmatprep.subr.mxu0 0.0
        %512 = vmatpush1.xpose.msra.mxu0 0.0
        %513 = vmatprep.subr.mxu0 0.0
        %514 = vmatpush1.xpose.msra.mxu0 0.0
        %515 = vmatprep.subr.mxu0 0.0
        %516 = vmatpush1.xpose.msra.mxu0 0.0
        %517 = vmatprep.subr.mxu0 0.0
        %518 = vmatpush1.xpose.msra.mxu0 0.0
        %519 = vmatprep.subr.mxu0 0.0
        %520 = vmatpush1.xpose.msra.mxu0 0.0
        %521 = vmatprep.subr.mxu0 0.0
        %522 = vmatpush1.xpose.msra.mxu0 0.0
        %523 = vmatprep.subr.mxu0 0.0
        %524 = vmatpush1.xpose.msra.mxu0 0.0
        %525 = vmatprep.subr.mxu0 0.0
        %526 = vmatpush1.xpose.msra.mxu0 0.0
        %527 = vmatprep.subr.mxu0 0.0
        %528 = vmatpush1.xpose.msra.mxu0 0.0
        %529 = vmatprep.subr.mxu0 0.0
        %530 = vmatpush1.xpose.msra.mxu0 0.0
        %531 = vmatprep.subr.mxu0 0.0
        %532 = vmatpush1.xpose.msra.mxu0 0.0
        %533 = vmatprep.subr.mxu0 0.0
        %534 = vmatpush1.xpose.msra.mxu0 0.0
        %535 = vmatprep.subr.mxu0 0.0
        %536 = vmatpush1.xpose.msra.mxu0 0.0
        %537 = vmatprep.subr.mxu0 0.0
        %538 = vmatpush1.xpose.msra.mxu0 0.0
        %539 = vmatprep.subr.mxu0 0.0
        %540 = vmatpush1.xpose.msra.mxu0 0.0
        %541 = vmatprep.subr.mxu0 0.0
        %542 = vmatpush1.xpose.msra.mxu0 0.0
        %543 = vmatprep.subr.mxu0 0.0
        %544 = vmatpush1.xpose.msra.mxu0 0.0
        %545 = vmatprep.subr.mxu0 0.0
        %546 = vmatpush1.xpose.msra.mxu0 0.0
        %547 = vmatprep.subr.mxu0 0.0
        %548 = vmatpush1.xpose.msra.mxu0 0.0
        %549 = vmatprep.subr.mxu0 0.0
        %550 = vmatpush1.xpose.msra.mxu0 0.0
        %551 = vmatprep.subr.mxu0 0.0
        %552 = vmatpush1.xpose.msra.mxu0 0.0
        %553 = vmatprep.subr.mxu0 0.0
        %554 = vmatpush1.xpose.msra.mxu0 0.0
        %555 = vmatprep.subr.mxu0 0.0
        %556 = vmatpush1.xpose.msra.mxu0 0.0
        %557 = vmatprep.subr.mxu0 0.0
        %558 = vmatpush1.xpose.msra.mxu0 0.0
        %559 = vmatprep.subr.mxu0 0.0
        %560 = vmatpush1.xpose.msra.mxu0 0.0
        %561 = vmatprep.mubr.f32.mxu0 0.0
        %562 = vmatmul.mubr.f32.gmra.mrb[0].mxu0 %v492
        %v563 = vpop.f32.mrb[0].mxu0
        %v564 = vadd.f32 0.0, %v563
        %v565 = vpop.f32.mrb[0].mxu0
        %566 = vdwg.mxu0
        %vm567 = vcmask 64512
        %v568 = vsel %vm567, %v564, -inf
        %569 = vmax.xlane.f32.xlu0 %v568
        %v570 = vpop.xlane.xlu0 %569
        %v571 = vsub.f32 %v564, %v570
        %v572 = vmul.f32 %v571, 1.442695
        %v573 = vpow.pop %v572
        %v574 = vsel %vm567, %v573, 0.0
        %575 = vadd.xlane.f32.xlu0 %v574
        %v576 = vpop.xlane.xlu0 %575
        %v577 = vrcp.pop %v576
        %v578 = vmul.f32 %v573, %v577
        %v579 = vld [vmem:[%s485] sm:$0x1]
        %v580 = vsub.f32 1.0, %v579
        %v581 = vld [vmem:[%s415] sm:$0xff]
        %v582 = vsub.f32 1.0, %v581
        %v584 = vlaneseq
        %v585 = vshrl.u32 %v584, 7
        %v586 = vsub.s32 0, %v585
        %v587 = vrot.slane %v580, %v586
        %v589 = vmul.f32 %v587, %v582
        %v590 = vld [vmem:[%s424] sm:$0xff]
        %v591 = vmul.f32 %v589, %v590
        %s592 = smul.u32 %s39, 8
        %v593 = vlaneseq
        %v594 = vshrl.u32 %v593, 7
        %v595 = vstv %s592
        %v596 = vadd.s32 %v594, %v595
        %v597 = vlaneseq
        %v598 = vand.u32 %v597, 127
        %vm599 = vcmp.le.s32.totalorder %v598, %v596
        %v600 = vmul.f32 %v578, %v591
        %v601 = vsel %vm599, %v600, 0.0
        %602 = vst.msk [vmem:[%s482] sm:$0xff] %vm567, %v601
        %v604 = vsel %vm567, %v601, 0
        %606 = vmatprep.subr.mxu0 0.0
        %607 = vmatpush1.msra.mxu0 %v489
        %608 = vmatprep.subr.mxu0 0.0
        %609 = vmatpush1.msra.mxu0 0.0
        %610 = vmatprep.subr.mxu0 0.0
        %611 = vmatpush1.msra.mxu0 0.0
        %612 = vmatprep.subr.mxu0 0.0
        %613 = vmatpush1.msra.mxu0 0.0
        %614 = vmatprep.subr.mxu0 0.0
        %615 = vmatpush1.msra.mxu0 0.0
        %616 = vmatprep.subr.mxu0 0.0
        %617 = vmatpush1.msra.mxu0 0.0
        %618 = vmatprep.subr.mxu0 0.0
        %619 = vmatpush1.msra.mxu0 0.0
        %620 = vmatprep.subr.mxu0 0.0
        %621 = vmatpush1.msra.mxu0 0.0
        %622 = vmatprep.subr.mxu0 0.0
        %623 = vmatpush1.msra.mxu0 0.0
        %624 = vmatprep.subr.mxu0 0.0
        %625 = vmatpush1.msra.mxu0 0.0
        %626 = vmatprep.subr.mxu0 0.0
        %627 = vmatpush1.msra.mxu0 0.0
        %628 = vmatprep.subr.mxu0 0.0
        %629 = vmatpush1.msra.mxu0 0.0
        %630 = vmatprep.subr.mxu0 0.0
        %631 = vmatpush1.msra.mxu0 0.0
        %632 = vmatprep.subr.mxu0 0.0
        %633 = vmatpush1.msra.mxu0 0.0
        %634 = vmatprep.subr.mxu0 0.0
        %635 = vmatpush1.msra.mxu0 0.0
        %636 = vmatprep.subr.mxu0 0.0
        %637 = vmatpush1.msra.mxu0 0.0
        %638 = vmatprep.subr.mxu0 0.0
        %639 = vmatpush1.msra.mxu0 0.0
        %640 = vmatprep.subr.mxu0 0.0
        %641 = vmatpush1.msra.mxu0 0.0
        %642 = vmatprep.subr.mxu0 0.0
        %643 = vmatpush1.msra.mxu0 0.0
        %644 = vmatprep.subr.mxu0 0.0
        %645 = vmatpush1.msra.mxu0 0.0
        %646 = vmatprep.subr.mxu0 0.0
        %647 = vmatpush1.msra.mxu0 0.0
        %648 = vmatprep.subr.mxu0 0.0
        %649 = vmatpush1.msra.mxu0 0.0
        %650 = vmatprep.subr.mxu0 0.0
        %651 = vmatpush1.msra.mxu0 0.0
        %652 = vmatprep.subr.mxu0 0.0
        %653 = vmatpush1.msra.mxu0 0.0
        %654 = vmatprep.subr.mxu0 0.0
        %655 = vmatpush1.msra.mxu0 0.0
        %656 = vmatprep.subr.mxu0 0.0
        %657 = vmatpush1.msra.mxu0 0.0
        %658 = vmatprep.subr.mxu0 0.0
        %659 = vmatpush1.msra.mxu0 0.0
        %660 = vmatprep.subr.mxu0 0.0
        %661 = vmatpush1.msra.mxu0 0.0
        %662 = vmatprep.subr.mxu0 0.0
        %663 = vmatpush1.msra.mxu0 0.0
        %664 = vmatprep.subr.mxu0 0.0
        %665 = vmatpush1.msra.mxu0 0.0
        %666 = vmatprep.subr.mxu0 0.0
        %667 = vmatpush1.msra.mxu0 0.0
        %668 = vmatprep.subr.mxu0 0.0
        %669 = vmatpush1.msra.mxu0 0.0
        %670 = vmatprep.mubr.f32.mxu0 0.0
        %671 = vmatmul.mubr.f32.gmra.mrb[0].mxu0 %v604
        %v672 = vpop.f32.mrb[0].mxu0
        %v673 = vadd.f32 0.0, %v672
        %v674 = vpop.f32.mrb[0].mxu0
        %675 = vdwg.mxu0
        %676 = vst.msk [vmem:[%s475] sm:$0xff] %vm490, %v673
        %s677 = sand.u32 %s218, 1
        %s678 = scalar_lea.sflag [#allocation4], %s677
        %s679 = sand.u32 %s218, 1
        %s680 = smul.addr %s679, 8
        %s681 = scalar_lea.vmem [#allocation11], %s680
        %s682 = sand.u32 %s246, 1
        %s683 = scalar_lea.sflag [#allocation13], %s682
        %s684 = sand.u32 %s246, 1
        %s685 = smul.addr %s684, 8
        %s686 = scalar_lea.vmem [#allocation12], %s685
        // Predicated region
        $region65: #{tpu_custom_call.1} parent=43 // pred_check
          %p687 = pneg %p228
        $region66: #{tpu_custom_call.1} parent=43 // pred_check_branch
          %689 = sbr.rel (%p687) target = $region68
        $region67: #{tpu_custom_call.1} parent=43 // pred_region
          %s691 = ssub.s32 128, 128
          %692 = vsyncadd %s678, %s691
          %s693 = sadd.s32 %s39, %s38
          %s694 = smul.addr %s693, 128
          %s695 = scalar_lea.hbm %s6, %s694
          %s697 = sshll.u32 %s681, 4
          %s698 = int_to_ptr.vmem [resolvable:$true] %s697
          %700 = dma.vmem_to_hbm [thread:$0]  %s698, 128, %s695, %s678
        $region68: #{tpu_custom_call.1} parent=43 // pred_fallthru
          _
        // Predicated region
        $region69: #{tpu_custom_call.1} parent=43 // pred_check
          %p701 = pneg %p256
        $region70: #{tpu_custom_call.1} parent=43 // pred_check_branch
          %703 = sbr.rel (%p701) target = $region72
        $region71: #{tpu_custom_call.1} parent=43 // pred_region
          %s705 = ssub.s32 128, 128
          %706 = vsyncadd %s683, %s705
          %s707 = sadd.s32 %s39, %s38
          %s708 = smul.addr %s707, 128
          %s709 = scalar_lea.hbm %s7, %s708
          %s711 = sshll.u32 %s686, 4
          %s712 = int_to_ptr.vmem [resolvable:$true] %s711
          %714 = dma.vmem_to_hbm [thread:$0]  %s712, 128, %s709, %s683
        $region72: #{tpu_custom_call.1} parent=43 // pred_fallthru
          _
      $region44: #{tpu_custom_call.1} parent=5 // pred_fallthru
        _
      %p715 = scmp.le.s32.totalorder 2, %s29
      // Predicated region
      $region73: #{tpu_custom_call.1} parent=5 // pred_check
        %p716 = pneg %p715
      $region74: #{tpu_custom_call.1} parent=5 // pred_check_branch
        %718 = sbr.rel (%p716) target = $region76
      $region75: #{tpu_custom_call.1} parent=5 // pred_region
        %s719 = ssub.s32 %s29, 2
        // Predicated region
        $region77: #{tpu_custom_call.1} parent=75 // pred_check
          %p720 = pneg %p234
        $region78: #{tpu_custom_call.1} parent=75 // pred_check_branch
          %722 = sbr.rel (%p720) target = $region80
        $region79: #{tpu_custom_call.1} parent=75 // pred_region
          %s723 = sand.u32 %s219, 1
          %s724 = scalar_lea.sflag [#allocation4], %s723
          %s725 = sand.u32 %s219, 1
          %s726 = smul.addr %s725, 8
          %s727 = scalar_lea.vmem [#allocation11], %s726
          %728 = dma.done %s724, 128
        $region80: #{tpu_custom_call.1} parent=75 // pred_fallthru
          _
        // Predicated region
        $region81: #{tpu_custom_call.1} parent=75 // pred_check
          %p729 = pneg %p262
        $region82: #{tpu_custom_call.1} parent=75 // pred_check_branch
          %731 = sbr.rel (%p729) target = $region84
        $region83: #{tpu_custom_call.1} parent=75 // pred_region
          %s732 = sand.u32 %s247, 1
          %s733 = scalar_lea.sflag [#allocation13], %s732
          %s734 = sand.u32 %s247, 1
          %s735 = smul.addr %s734, 8
          %s736 = scalar_lea.vmem [#allocation12], %s735
          %737 = dma.done %s733, 128
        $region84: #{tpu_custom_call.1} parent=75 // pred_fallthru
          _
      $region76: #{tpu_custom_call.1} parent=5 // pred_fallthru
        _
    $region6: #{tpu_custom_call.1} parent=1 // loop_footer
      %s33 = sadd.s32 1, %s29
    $region7: #{tpu_custom_call.1} parent=1 // loop_footer_branch
      %28 = sbr.rel target = $region3
    $region8: #{tpu_custom_call.1} parent=1 // loop_exit
      _
    %738 = vsyncpa [#allocation3], 1
    %s739 = scalar_lea.sflag [#allocation3], 1
    %740 = vsyncpa %s739, 1
    %741 = vsyncpa [#allocation6], 1
    %s742 = scalar_lea.sflag [#allocation6], 1
    %743 = vsyncpa %s742, 1
    %744 = vsyncpa [#allocation9], 1
    %s745 = scalar_lea.sflag [#allocation9], 1
    %746 = vsyncpa %s745, 1
    %747 = vsyncpa [#allocation4], 1
    %s748 = scalar_lea.sflag [#allocation4], 1
    %749 = vsyncpa %s748, 1
    %750 = vsyncpa [#allocation13], 1
    %s751 = scalar_lea.sflag [#allocation13], 1
    %752 = vsyncpa %s751, 1

</llo_original>
